<compile_context>
chip_gen: v6e
topology: v6e:2x2x1
jax: 0.10.0
libtpu: 0.0.40
codegen_flags: <defaults>
</compile_context>

<pallas_src>
import math
import functools

import jax
import jax.numpy as jnp
from jax import lax
from jax.experimental import pallas as pl
from jax.experimental.pallas import tpu as pltpu


def _vmem_limit_bytes():
    """Generation-aware scoped-VMEM budget (leaves double-buffer headroom)."""
    phys = 64 * 1024 * 1024                      # safe default (v7x per-TC)
    try:
        info = pltpu.get_tpu_info()
        cap = getattr(info, "vmem_capacity_bytes", None)
        if cap:
            phys = int(cap)
    except Exception:
        pass
    # 3/4 of physical: ~96 MiB on v5e/v6e (128 MiB), ~48 MiB on v7x (64 MiB).
    return (phys * 3) // 4


def _pick_tile(n, candidates):
    for t in candidates:
        if t <= n and n % t == 0:
            return t
    return n


def _pick_tile_m(m):
    return _pick_tile(m, (1024, 512, 256, 128, 64, 32, 16, 8))


def _pick_tile_n(n):
    return _pick_tile(n, (2048, 1024, 512, 256, 128))


def _pick_tile_q(s):
    return _pick_tile(s, (512, 256, 128, 64, 32, 16, 8))


# ---------------------------------------------------------------------------
# Kernels
# ---------------------------------------------------------------------------
def _linear_kernel(x_ref, w_ref, b_ref, o_ref, *, compute_dtype):
    # x: [tm, Din] streamed; w: [Din, tn]; b: [1, tn]  (w pre-cast to bf16)
    x = x_ref[...].astype(compute_dtype)
    acc = jnp.dot(x, w_ref[...], preferred_element_type=jnp.float32)
    o_ref[...] = (acc + b_ref[...]).astype(o_ref.dtype)


def _qkv_proj_kernel(x_ref, wq_ref, wk_ref, wv_ref, bq_ref, bk_ref, bv_ref,
                     q_ref, k_ref, v_ref, *, compute_dtype):
    # Fused QKV projection: x tile is read/cast once, reused for 3 GEMMs.
    x = x_ref[...].astype(compute_dtype)
    q_ref[...] = (jnp.dot(x, wq_ref[...], preferred_element_type=jnp.float32)
                  + bq_ref[...]).astype(q_ref.dtype)
    k_ref[...] = (jnp.dot(x, wk_ref[...], preferred_element_type=jnp.float32)
                  + bk_ref[...]).astype(k_ref.dtype)
    v_ref[...] = (jnp.dot(x, wv_ref[...], preferred_element_type=jnp.float32)
                  + bv_ref[...]).astype(v_ref.dtype)


def _attend(q_ref, k_ref, v_ref, mask_ref, o_ref, *, h, d_k, scale,
            compute_dtype):
    """q_ref: [1, tq, D]; k_ref/v_ref: [1, Sk, D]; mask_ref: [1, tq, Sk]|None."""
    # fold 1/sqrt(d_k) into q ONCE (f32 scale, then down-cast for MXU)
    q = (q_ref[0].astype(jnp.float32) * scale).astype(compute_dtype)
    k = k_ref[0].astype(compute_dtype)
    v = v_ref[0].astype(compute_dtype)

    bias = None
    if mask_ref is not None:
        # one compare+select for all heads; per head it is a cheap add
        bias = jnp.where(mask_ref[0] == 0,
                         jnp.float32(-1000000000.0), jnp.float32(0.0))

    pvs = []
    for hd in range(h):                       # static head loop (small h)
        lo = hd * d_k
        qh = q[:, lo:lo + d_k]
        kh = k[:, lo:lo + d_k]
        vh = v[:, lo:lo + d_k]
        # q @ k^T without materializing a transpose: contract last dims.
        scores = lax.dot_general(qh, kh, (((1,), (1,)), ((), ())),
                                 preferred_element_type=jnp.float32)
        if bias is not None:
            scores = scores + bias
        scores = scores - jnp.max(scores, axis=-1, keepdims=True)
        e = jnp.exp(scores)
        inv_l = pl.reciprocal(jnp.sum(e, axis=-1, keepdims=True), approx=True)
        pvs.append(jnp.dot((e * inv_l).astype(compute_dtype), vh,
                           preferred_element_type=jnp.float32))
    # single lane-dense [tq, D] store instead of h masked d_k-wide stores
    o_ref[0, :, :] = jnp.concatenate(pvs, axis=-1).astype(o_ref.dtype)


def _attention_kernel(q_ref, k_ref, v_ref, o_ref, *, h, d_k, scale,
                      compute_dtype):
    _attend(q_ref, k_ref, v_ref, None, o_ref,
            h=h, d_k=d_k, scale=scale, compute_dtype=compute_dtype)


def _attention_kernel_masked(mask_ref, q_ref, k_ref, v_ref, o_ref, *, h, d_k,
                             scale, compute_dtype):
    _attend(q_ref, k_ref, v_ref, mask_ref, o_ref,
            h=h, d_k=d_k, scale=scale, compute_dtype=compute_dtype)


# ---------------------------------------------------------------------------
# Wrappers
# ---------------------------------------------------------------------------
def _pallas_linear(x2d, w, b, *, compute_dtype, out_dtype):
    """y = x2d @ w + b, tiled over (rows, out-columns)."""
    M, Din = x2d.shape
    Dout = w.shape[1]
    tm = _pick_tile_m(M)
    tn = _pick_tile_n(Dout)
    w = w.astype(compute_dtype)                       # bf16-resident weight
    b = b.astype(jnp.float32).reshape(1, Dout)
    return pl.pallas_call(
        functools.partial(_linear_kernel, compute_dtype=compute_dtype),
        out_shape=jax.ShapeDtypeStruct((M, Dout), out_dtype),
        grid=(M // tm, Dout // tn),
        in_specs=[
            pl.BlockSpec((tm, Din), lambda i, j: (i, 0)),   # activation stream
            pl.BlockSpec((Din, tn), lambda i, j: (0, j)),   # weight column tile
            pl.BlockSpec((1, tn), lambda i, j: (0, j)),     # bias column tile
        ],
        out_specs=pl.BlockSpec((tm, tn), lambda i, j: (i, j)),
        compiler_params=pltpu.CompilerParams(
            dimension_semantics=("parallel", "parallel"),
            vmem_limit_bytes=_vmem_limit_bytes(),
        ),
    )(x2d, w, b)


def _pallas_fused_qkv(x2d, params, *, compute_dtype, out_dtype):
    """q, k, v = x2d @ {Wq, Wk, Wv} + {bq, bk, bv} with x read once per tile."""
    M, Din = x2d.shape
    Dout = params["wq"].shape[1]
    tm = _pick_tile_m(M)
    tn = _pick_tile_n(Dout)
    ws = [params[n].astype(compute_dtype) for n in ("wq", "wk", "wv")]
    bs = [params[n].astype(jnp.float32).reshape(1, Dout)
          for n in ("bq", "bk", "bv")]
    out = jax.ShapeDtypeStruct((M, Dout), out_dtype)
    x_spec = pl.BlockSpec((tm, Din), lambda i, j: (i, 0))
    w_spec = pl.BlockSpec((Din, tn), lambda i, j: (0, j))
    b_spec = pl.BlockSpec((1, tn), lambda i, j: (0, j))
    o_spec = pl.BlockSpec((tm, tn), lambda i, j: (i, j))
    return pl.pallas_call(
        functools.partial(_qkv_proj_kernel, compute_dtype=compute_dtype),
        out_shape=(out, out, out),
        grid=(M // tm, Dout // tn),
        in_specs=[x_spec, w_spec, w_spec, w_spec, b_spec, b_spec, b_spec],
        out_specs=(o_spec, o_spec, o_spec),
        compiler_params=pltpu.CompilerParams(
            dimension_semantics=("parallel", "parallel"),
            vmem_limit_bytes=_vmem_limit_bytes(),
        ),
    )(x2d, *ws, *bs)


def _pallas_attention(q3, k3, v3, mask, *, h, d_k, scale, compute_dtype,
                      out_dtype):
    B, Sq, D = q3.shape
    Sk = k3.shape[1]
    tq = _pick_tile_q(Sq)
    nq = Sq // tq

    q_spec = pl.BlockSpec((1, tq, D), lambda b, qi: (b, qi, 0))
    kv_spec = pl.BlockSpec((1, Sk, D), lambda b, qi: (b, 0, 0))
    o_spec = pl.BlockSpec((1, tq, D), lambda b, qi: (b, qi, 0))
    out_shape = jax.ShapeDtypeStruct((B, Sq, D), out_dtype)
    kern_kwargs = dict(h=h, d_k=d_k, scale=scale, compute_dtype=compute_dtype)
    cparams = pltpu.CompilerParams(
        dimension_semantics=("parallel", "parallel"),
        vmem_limit_bytes=_vmem_limit_bytes(),
    )

    if mask is None:
        return pl.pallas_call(
            functools.partial(_attention_kernel, **kern_kwargs),
            out_shape=out_shape,
            grid=(B, nq),
            in_specs=[q_spec, kv_spec, kv_spec],
            out_specs=o_spec,
            compiler_params=cparams,
        )(q3, k3, v3)

    mask = mask.astype(jnp.int32)              # no f32 mask HBM traffic
    m_spec = pl.BlockSpec((1, tq, Sk), lambda b, qi: (b, qi, 0))
    return pl.pallas_call(
        functools.partial(_attention_kernel_masked, **kern_kwargs),
        out_shape=out_shape,
        grid=(B, nq),
        in_specs=[m_spec, q_spec, kv_spec, kv_spec],
        out_specs=o_spec,
        compiler_params=cparams,
    )(mask, q3, k3, v3)


def multi_headed_attention(query, key, value, params, h, mask=None,
                           compute_dtype=jnp.bfloat16):
    """Forward pass of MultiHeadedAttention.

    query: [B, Sq, d_model] f32; key/value: [B, Sk, d_model] f32
    mask (optional): [B, Sq, Sk]; positions where mask == 0 get -1e9 pre-softmax
    params: dict with wq,bq,wk,bk,wv,bv,wo,bo (weights stored [in, out],
            i.e. transposed vs nn.Linear, so y = x @ W + b)
    """
    B, Sq, D = query.shape
    Sk = key.shape[1]
    assert D % h == 0
    d_k = D // h
    scale = 1.0 / math.sqrt(d_k)
    inter_dtype = compute_dtype        # half-width inter-kernel HBM traffic

    # --- Q/K/V projections ---
    if (query is key) and (key is value):
        # self-attention: fused QKV (one streamed pass over the activation).
        # NOTE: identity-gated fast path; distinct-but-equal arrays take the
        # 3-GEMM path below (perf-only, not a correctness issue).
        q2d, k2d, v2d = _pallas_fused_qkv(
            query.reshape(B * Sq, D), params,
            compute_dtype=compute_dtype, out_dtype=inter_dtype)
        k_len = Sq
    else:
        q2d = _pallas_linear(query.reshape(B * Sq, D), params["wq"],
                             params["bq"], compute_dtype=compute_dtype,
                             out_dtype=inter_dtype)
        k2d = _pallas_linear(key.reshape(B * Sk, D), params["wk"],
                             params["bk"], compute_dtype=compute_dtype,
                             out_dtype=inter_dtype)
        v2d = _pallas_linear(value.reshape(B * Sk, D), params["wv"],
                             params["bv"], compute_dtype=compute_dtype,
                             out_dtype=inter_dtype)
        k_len = Sk

    # free (contiguous) reshapes only — NO head-split transposes.
    q3 = q2d.reshape(B, Sq, D)
    k3 = k2d.reshape(B, k_len, D)
    v3 = v2d.reshape(B, k_len, D)

    attn = _pallas_attention(q3, k3, v3, mask, h=h, d_k=d_k, scale=scale,
                             compute_dtype=compute_dtype, out_dtype=inter_dtype)

    # heads already merged along the feature dim -> straight into out proj.
    out = _pallas_linear(attn.reshape(B * Sq, D), params["wo"], params["bo"],
                         compute_dtype=compute_dtype, out_dtype=jnp.float32)
    return out.reshape(B, Sq, D)


# ---------------------------------------------------------------------------
# Pure-JAX reference (for a sanity check)
# ---------------------------------------------------------------------------
def _reference(query, key, value, params, h, mask=None):
    B, Sq, D = query.shape
    d_k = D // h

    def lin(x, w, b):
        return x @ w + b

    def split(t):
        return t.reshape(B, -1, h, d_k).transpose(0, 2, 1, 3)

    q = split(lin(query, params["wq"], params["bq"]))
    k = split(lin(key, params["wk"], params["bk"]))
    v = split(lin(value, params["wv"], params["bv"]))
    scores = jnp.einsum("bhqd,bhkd->bhqk", q, k) / math.sqrt(d_k)
    if mask is not None:
        scores = jnp.where(mask[:, None, :, :] == 0, -1e9, scores)
    p = jax.nn.softmax(scores, axis=-1)
    x = jnp.einsum("bhqk,bhkd->bhqd", p, v)
    x = x.transpose(0, 2, 1, 3).reshape(B, Sq, D)
    return lin(x, params["wo"], params["bo"])


# ---------------------------------------------------------------------------
# Main
# ---------------------------------------------------------------------------
if __name__ == "__main__":
    B, S, d_model, h = 2, 8, 32, 4

    key0 = jax.random.PRNGKey(0)
    keys = jax.random.split(key0, 12)

    def init_linear(kw, kb, din, dout):
        bound = 1.0 / math.sqrt(din)
        w = jax.random.uniform(kw, (din, dout), jnp.float32, -bound, bound)
        b = jax.random.uniform(kb, (dout,), jnp.float32, -bound, bound)
        return w, b

    wq, bq = init_linear(keys[0], keys[1], d_model, d_model)
    wk, bk = init_linear(keys[2], keys[3], d_model, d_model)
    wv, bv = init_linear(keys[4], keys[5], d_model, d_model)
    wo, bo = init_linear(keys[6], keys[7], d_model, d_model)
    params = dict(wq=wq, bq=bq, wk=wk, bk=bk, wv=wv, bv=bv, wo=wo, bo=bo)

    x = jax.random.normal(keys[8], (B, S, d_model), jnp.float32)

    # causal mask (mask == 0 positions blocked), shape [B, S, S], int
    mask = jnp.tril(jnp.ones((S, S), jnp.int32))[None].repeat(B, axis=0)

    ref = _reference(x, x, x, params, h, mask=mask)

    # 1) self-attention, fused QKV, default bf16 compute, causal mask
    out = jax.block_until_ready(
        multi_headed_attention(x, x, x, params, h, mask=mask))
    assert out.shape == (B, S, d_model)
    assert jnp.allclose(out, ref, atol=5e-2, rtol=5e-2), "mismatch (bf16 self)"

    # 2) same path with f32 compute for tight parity with the reference
    out_f32 = jax.block_until_ready(
        multi_headed_attention(x, x, x, params, h, mask=mask,
                               compute_dtype=jnp.float32))
    assert jnp.allclose(out_f32, ref, atol=5e-3, rtol=5e-3), "mismatch (f32 self)"

    # 3) cross-attention path (separate projections), no mask, bf16 compute
    kv = jax.random.normal(keys[9], (B, S, d_model), jnp.float32)
    out2 = jax.block_until_ready(
        multi_headed_attention(x, kv, kv, params, h, mask=None))
    ref2 = _reference(x, kv, kv, params, h, mask=None)
    assert jnp.allclose(out2, ref2, atol=5e-2, rtol=5e-2), "mismatch (cross)"

    print("KERNEL_OK")
</pallas_src>

<mosaic_0001>
module attributes {stable_mosaic.version = 11 : i64} {
  func.func @_qkv_proj_kernel(%arg0: i32, %arg1: i32, %arg2: memref<16x32xf32, #tpu.memory_space<vmem>>, %arg3: memref<32x32xbf16, #tpu.memory_space<vmem>>, %arg4: memref<32x32xbf16, #tpu.memory_space<vmem>>, %arg5: memref<32x32xbf16, #tpu.memory_space<vmem>>, %arg6: memref<1x32xf32, #tpu.memory_space<vmem>>, %arg7: memref<1x32xf32, #tpu.memory_space<vmem>>, %arg8: memref<1x32xf32, #tpu.memory_space<vmem>>, %arg9: memref<16x32xbf16, #tpu.memory_space<vmem>>, %arg10: memref<16x32xbf16, #tpu.memory_space<vmem>>, %arg11: memref<16x32xbf16, #tpu.memory_space<vmem>>) attributes {dimension_semantics = [#tpu.dimension_semantics<parallel>, #tpu.dimension_semantics<parallel>], iteration_bounds = array<i64: 1, 1>, scalar_prefetch = 0 : i64, scratch_operands = 0 : i64, tpu.core_type = #tpu.core_type<tc>, window_params = [{transform_indices = @transform_0, window_bounds = array<i64: 16, 32>}, {transform_indices = @transform_1, window_bounds = array<i64: 32, 32>}, {transform_indices = @transform_2, window_bounds = array<i64: 32, 32>}, {transform_indices = @transform_3, window_bounds = array<i64: 32, 32>}, {transform_indices = @transform_4, window_bounds = array<i64: 1, 32>}, {transform_indices = @transform_5, window_bounds = array<i64: 1, 32>}, {transform_indices = @transform_6, window_bounds = array<i64: 1, 32>}, {transform_indices = @transform_7, window_bounds = array<i64: 16, 32>}, {transform_indices = @transform_8, window_bounds = array<i64: 16, 32>}, {transform_indices = @transform_9, window_bounds = array<i64: 16, 32>}]} {
    %c0 = arith.constant 0 : index
    %c0_0 = arith.constant 0 : index
    %0 = vector.load %arg2[%c0, %c0_0] : memref<16x32xf32, #tpu.memory_space<vmem>>, vector<16x32xf32>
    %1 = arith.truncf %0 : vector<16x32xf32> to vector<16x32xbf16>
    %c0_1 = arith.constant 0 : index
    %c0_2 = arith.constant 0 : index
    %2 = vector.load %arg3[%c0_1, %c0_2] : memref<32x32xbf16, #tpu.memory_space<vmem>>, vector<32x32xbf16>
    %cst = arith.constant dense<0.000000e+00> : vector<16x32xf32>
    %3 = tpu.matmul %1, %2, %cst {dimension_numbers = #tpu.dot_dimension_numbers<[1], [0], [0], [1], [0, 0, 1, 1], [], []>} : vector<16x32xbf16>, vector<32x32xbf16>, vector<16x32xf32> -> vector<16x32xf32>
    %c0_3 = arith.constant 0 : index
    %c0_4 = arith.constant 0 : index
    %4 = vector.load %arg6[%c0_3, %c0_4] : memref<1x32xf32, #tpu.memory_space<vmem>>, vector<1x32xf32>
    %5 = vector.broadcast %4 : vector<1x32xf32> to vector<16x32xf32>
    %6 = arith.addf %3, %5 : vector<16x32xf32>
    %7 = arith.truncf %6 : vector<16x32xf32> to vector<16x32xbf16>
    %c0_5 = arith.constant 0 : index
    %c0_6 = arith.constant 0 : index
    %8 = vector.load %arg9[%c0_5, %c0_6] : memref<16x32xbf16, #tpu.memory_space<vmem>>, vector<16x32xbf16>
    tpu.vector_store %arg9[%c0_5, %c0_6], %7 {strides = array<i32>} : memref<16x32xbf16, #tpu.memory_space<vmem>>, vector<16x32xbf16>,
    %c0_7 = arith.constant 0 : index
    %c0_8 = arith.constant 0 : index
    %9 = vector.load %arg4[%c0_7, %c0_8] : memref<32x32xbf16, #tpu.memory_space<vmem>>, vector<32x32xbf16>
    %cst_9 = arith.constant dense<0.000000e+00> : vector<16x32xf32>
    %10 = tpu.matmul %1, %9, %cst_9 {dimension_numbers = #tpu.dot_dimension_numbers<[1], [0], [0], [1], [0, 0, 1, 1], [], []>} : vector<16x32xbf16>, vector<32x32xbf16>, vector<16x32xf32> -> vector<16x32xf32>
    %c0_10 = arith.constant 0 : index
    %c0_11 = arith.constant 0 : index
    %11 = vector.load %arg7[%c0_10, %c0_11] : memref<1x32xf32, #tpu.memory_space<vmem>>, vector<1x32xf32>
    %12 = vector.broadcast %11 : vector<1x32xf32> to vector<16x32xf32>
    %13 = arith.addf %10, %12 : vector<16x32xf32>
    %14 = arith.truncf %13 : vector<16x32xf32> to vector<16x32xbf16>
    %c0_12 = arith.constant 0 : index
    %c0_13 = arith.constant 0 : index
    %15 = vector.load %arg10[%c0_12, %c0_13] : memref<16x32xbf16, #tpu.memory_space<vmem>>, vector<16x32xbf16>
    tpu.vector_store %arg10[%c0_12, %c0_13], %14 {strides = array<i32>} : memref<16x32xbf16, #tpu.memory_space<vmem>>, vector<16x32xbf16>,
    %c0_14 = arith.constant 0 : index
    %c0_15 = arith.constant 0 : index
    %16 = vector.load %arg5[%c0_14, %c0_15] : memref<32x32xbf16, #tpu.memory_space<vmem>>, vector<32x32xbf16>
    %cst_16 = arith.constant dense<0.000000e+00> : vector<16x32xf32>
    %17 = tpu.matmul %1, %16, %cst_16 {dimension_numbers = #tpu.dot_dimension_numbers<[1], [0], [0], [1], [0, 0, 1, 1], [], []>} : vector<16x32xbf16>, vector<32x32xbf16>, vector<16x32xf32> -> vector<16x32xf32>
    %c0_17 = arith.constant 0 : index
    %c0_18 = arith.constant 0 : index
    %18 = vector.load %arg8[%c0_17, %c0_18] : memref<1x32xf32, #tpu.memory_space<vmem>>, vector<1x32xf32>
    %19 = vector.broadcast %18 : vector<1x32xf32> to vector<16x32xf32>
    %20 = arith.addf %17, %19 : vector<16x32xf32>
    %21 = arith.truncf %20 : vector<16x32xf32> to vector<16x32xbf16>
    %c0_19 = arith.constant 0 : index
    %c0_20 = arith.constant 0 : index
    %22 = vector.load %arg11[%c0_19, %c0_20] : memref<16x32xbf16, #tpu.memory_space<vmem>>, vector<16x32xbf16>
    tpu.vector_store %arg11[%c0_19, %c0_20], %21 {strides = array<i32>} : memref<16x32xbf16, #tpu.memory_space<vmem>>, vector<16x32xbf16>,
    return
  }
  func.func @transform_0(%arg0: i32, %arg1: i32) -> (i32, i32) {
    %c0_i32 = arith.constant 0 : i32
    %c0_i32_0 = arith.constant 0 : i32
    return %arg0, %c0_i32 : i32, i32
  }
  func.func @transform_1(%arg0: i32, %arg1: i32) -> (i32, i32) {
    %c0_i32 = arith.constant 0 : i32
    %c0_i32_0 = arith.constant 0 : i32
    return %c0_i32, %arg1 : i32, i32
  }
  func.func @transform_2(%arg0: i32, %arg1: i32) -> (i32, i32) {
    %c0_i32 = arith.constant 0 : i32
    %c0_i32_0 = arith.constant 0 : i32
    return %c0_i32, %arg1 : i32, i32
  }
  func.func @transform_3(%arg0: i32, %arg1: i32) -> (i32, i32) {
    %c0_i32 = arith.constant 0 : i32
    %c0_i32_0 = arith.constant 0 : i32
    return %c0_i32, %arg1 : i32, i32
  }
  func.func @transform_4(%arg0: i32, %arg1: i32) -> (i32, i32) {
    %c0_i32 = arith.constant 0 : i32
    %c0_i32_0 = arith.constant 0 : i32
    return %c0_i32, %arg1 : i32, i32
  }
  func.func @transform_5(%arg0: i32, %arg1: i32) -> (i32, i32) {
    %c0_i32 = arith.constant 0 : i32
    %c0_i32_0 = arith.constant 0 : i32
    return %c0_i32, %arg1 : i32, i32
  }
  func.func @transform_6(%arg0: i32, %arg1: i32) -> (i32, i32) {
    %c0_i32 = arith.constant 0 : i32
    %c0_i32_0 = arith.constant 0 : i32
    return %c0_i32, %arg1 : i32, i32
  }
  func.func @transform_7(%arg0: i32, %arg1: i32) -> (i32, i32) {
    %c0_i32 = arith.constant 0 : i32
    return %arg0, %arg1 : i32, i32
  }
  func.func @transform_8(%arg0: i32, %arg1: i32) -> (i32, i32) {
    %c0_i32 = arith.constant 0 : i32
    return %arg0, %arg1 : i32, i32
  }
  func.func @transform_9(%arg0: i32, %arg1: i32) -> (i32, i32) {
    %c0_i32 = arith.constant 0 : i32
    return %arg0, %arg1 : i32, i32
  }
}

</mosaic_0001>

<llo_original>
// kernel: tpu_custom_call.1
$region0: #{tpu_custom_call.1}
  #allocation0 [shape = 'u32[]', space=smem, size = 0x4, offset = 0x4, fixed_abs, tag = 'smem constant byte address 0x4 - core index']
  #allocation1 [shape = 'u32[144,128]{1,0:T(1,128)}', space=vmem, size = 0x12000, scoped, tag = 'internal scratch']
  %s0 = inlined_call_operand.hbm [shape: f32[16,32], index: 0, kind: input, shape index: {}]
  %s1 = inlined_call_operand.hbm [shape: bf16[32,32], index: 1, kind: input, shape index: {}]
  %s2 = inlined_call_operand.hbm [shape: bf16[32,32], index: 2, kind: input, shape index: {}]
  %s3 = inlined_call_operand.hbm [shape: bf16[32,32], index: 3, kind: input, shape index: {}]
  %s4 = inlined_call_operand.vmem [shape: f32[1,32], index: 4, kind: input, shape index: {}]
  %s5 = inlined_call_operand.vmem [shape: f32[1,32], index: 5, kind: input, shape index: {}]
  %s6 = inlined_call_operand.vmem [shape: f32[1,32], index: 6, kind: input, shape index: {}]
  %s7 = inlined_call_operand.hbm [shape: bf16[16,32], index: 7, kind: output, shape index: {0}]
  %s8 = inlined_call_operand.hbm [shape: bf16[16,32], index: 8, kind: output, shape index: {1}]
  %s9 = inlined_call_operand.hbm [shape: bf16[16,32], index: 9, kind: output, shape index: {2}]
  %10 = xla_tuple %s7, %s8, %s9
  %s11 = sld [smem:[#allocation0]]
  $region70: #{tpu_custom_call.1} parent=0
    _
  %s13 = ssub.s32 1, %s11
  %s14 = scalar_select 0, %s13, %s11
  $region1: #{tpu_custom_call.1} parent=0
    #allocation2 [shape = 'u8[8192]{0}', space=vmem, size = 0x2000, scoped, tag = 'input window, operand 0, single buffered']
    #allocation3 [shape = 's32[1]{0}', space=sflag, size = 0x4, scoped, tag = 'scoped memory for tpu_custom_call.1']
    #allocation4 [shape = 's32[1]{0}', space=sflag, size = 0x4, scoped, tag = 'scoped memory for tpu_custom_call.1']
    #allocation5 [shape = 'u8[8192]{0}', space=vmem, size = 0x2000, scoped, tag = 'input window, operand 1, single buffered']
    #allocation6 [shape = 's32[1]{0}', space=sflag, size = 0x4, scoped, tag = 'scoped memory for tpu_custom_call.1']
    #allocation7 [shape = 'u8[8192]{0}', space=vmem, size = 0x2000, scoped, tag = 'input window, operand 2, single buffered']
    #allocation8 [shape = 'u8[8192]{0}', space=vmem, size = 0x2000, scoped, tag = 'input window, operand 3, single buffered']
    #allocation9 [shape = 's32[1]{0}', space=sflag, size = 0x4, scoped, tag = 'scoped memory for tpu_custom_call.1']
    #allocation10 [shape = 'u8[4096]{0}', space=vmem, size = 0x1000, scoped, tag = 'output window, operand 0, single buffered']
    #allocation11 [shape = 'u8[4096]{0}', space=vmem, size = 0x1000, scoped, tag = 'output window, operand 1, single buffered']
    #allocation12 [shape = 's32[1]{0}', space=sflag, size = 0x4, scoped, tag = 'scoped memory for tpu_custom_call.1']
    #allocation13 [shape = 'u8[4096]{0}', space=vmem, size = 0x1000, scoped, tag = 'output window, operand 2, single buffered']
    %15 = vsyncpa [#allocation3], 0
    %16 = vsyncpa [#allocation6], 0
    %17 = vsyncpa [#allocation9], 0
    %18 = vsyncpa [#allocation4], 0
    %19 = vsyncpa [#allocation12], 0
    // Predicated region
    $region2: #{tpu_custom_call.1} parent=1 // pred_check
      _
    $region3: #{tpu_custom_call.1} parent=1 // pred_check_branch
      %21 = sbr.rel (0) target = $region5
    $region4: #{tpu_custom_call.1} parent=1 // pred_region
      %s23 = ssub.s32 256, 256
      %24 = vsyncadd [#allocation3], %s23
      %s25 = sshll.u32 [#allocation2], 4
      %s26 = int_to_ptr.vmem [resolvable:$true] %s25
      %31 = dma.hbm_to_vmem [thread:$0]  %s0, 256, %s26, [#allocation3], 128, 128, 8
    $region5: #{tpu_custom_call.1} parent=1 // pred_fallthru
      _
    // Predicated region
    $region6: #{tpu_custom_call.1} parent=1 // pred_check
      _
    $region7: #{tpu_custom_call.1} parent=1 // pred_check_branch
      %33 = sbr.rel (0) target = $region9
    $region8: #{tpu_custom_call.1} parent=1 // pred_region
      %s35 = ssub.s32 256, 256
      %36 = vsyncadd [#allocation6], %s35
      %s37 = sshll.u32 [#allocation5], 4
      %s38 = int_to_ptr.vmem [resolvable:$true] %s37
      %43 = dma.hbm_to_vmem [thread:$0]  %s1, 256, %s38, [#allocation6], 64, 64, 4
    $region9: #{tpu_custom_call.1} parent=1 // pred_fallthru
      _
    // Predicated region
    $region10: #{tpu_custom_call.1} parent=1 // pred_check
      _
    $region11: #{tpu_custom_call.1} parent=1 // pred_check_branch
      %45 = sbr.rel (0) target = $region13
    $region12: #{tpu_custom_call.1} parent=1 // pred_region
      %s47 = ssub.s32 256, 256
      %48 = vsyncadd [#allocation6], %s47
      %s49 = sshll.u32 [#allocation7], 4
      %s50 = int_to_ptr.vmem [resolvable:$true] %s49
      %55 = dma.hbm_to_vmem [thread:$0]  %s2, 256, %s50, [#allocation6], 64, 64, 4
    $region13: #{tpu_custom_call.1} parent=1 // pred_fallthru
      _
    // Predicated region
    $region14: #{tpu_custom_call.1} parent=1 // pred_check
      _
    $region15: #{tpu_custom_call.1} parent=1 // pred_check_branch
      %57 = sbr.rel (0) target = $region17
    $region16: #{tpu_custom_call.1} parent=1 // pred_region
      %s59 = ssub.s32 256, 256
      %60 = vsyncadd [#allocation9], %s59
      %s61 = sshll.u32 [#allocation8], 4
      %s62 = int_to_ptr.vmem [resolvable:$true] %s61
      %67 = dma.hbm_to_vmem [thread:$0]  %s3, 256, %s62, [#allocation9], 64, 64, 4
    $region17: #{tpu_custom_call.1} parent=1 // pred_fallthru
      _
    // Predicated region
    $region18: #{tpu_custom_call.1} parent=1 // pred_check
      _
    $region19: #{tpu_custom_call.1} parent=1 // pred_check_branch
      %69 = sbr.rel (0) target = $region21
    $region20: #{tpu_custom_call.1} parent=1 // pred_region
      _
    $region21: #{tpu_custom_call.1} parent=1 // pred_fallthru
      _
    // Predicated region
    $region22: #{tpu_custom_call.1} parent=1 // pred_check
      _
    $region23: #{tpu_custom_call.1} parent=1 // pred_check_branch
      %71 = sbr.rel (0) target = $region25
    $region24: #{tpu_custom_call.1} parent=1 // pred_region
      _
    $region25: #{tpu_custom_call.1} parent=1 // pred_fallthru
      _
    // Predicated region
    $region26: #{tpu_custom_call.1} parent=1 // pred_check
      _
    $region27: #{tpu_custom_call.1} parent=1 // pred_check_branch
      %73 = sbr.rel (0) target = $region29
    $region28: #{tpu_custom_call.1} parent=1 // pred_region
      _
    $region29: #{tpu_custom_call.1} parent=1 // pred_fallthru
      _
    // Predicated region
    $region30: #{tpu_custom_call.1} parent=1 // pred_check
      _
    $region31: #{tpu_custom_call.1} parent=1 // pred_check_branch
      %75 = sbr.rel (0) target = $region33
    $region32: #{tpu_custom_call.1} parent=1 // pred_region
      %76 = dma.done [#allocation3], 256
    $region33: #{tpu_custom_call.1} parent=1 // pred_fallthru
      _
    // Predicated region
    $region34: #{tpu_custom_call.1} parent=1 // pred_check
      _
    $region35: #{tpu_custom_call.1} parent=1 // pred_check_branch
      %78 = sbr.rel (0) target = $region37
    $region36: #{tpu_custom_call.1} parent=1 // pred_region
      %79 = dma.done [#allocation6], 256
    $region37: #{tpu_custom_call.1} parent=1 // pred_fallthru
      _
    // Predicated region
    $region38: #{tpu_custom_call.1} parent=1 // pred_check
      _
    $region39: #{tpu_custom_call.1} parent=1 // pred_check_branch
      %81 = sbr.rel (0) target = $region41
    $region40: #{tpu_custom_call.1} parent=1 // pred_region
      %82 = dma.done [#allocation6], 256
    $region41: #{tpu_custom_call.1} parent=1 // pred_fallthru
      _
    // Predicated region
    $region42: #{tpu_custom_call.1} parent=1 // pred_check
      _
    $region43: #{tpu_custom_call.1} parent=1 // pred_check_branch
      %84 = sbr.rel (0) target = $region45
    $region44: #{tpu_custom_call.1} parent=1 // pred_region
      %85 = dma.done [#allocation9], 256
    $region45: #{tpu_custom_call.1} parent=1 // pred_fallthru
      _
    %v87 = vld [vmem:[#allocation2] sm:$0xff]
    %v88 = vld [vmem:[#allocation2 + $0x8] sm:$0xff]
    %v89 = vpack.c.bf16 %v88, %v87
    %v90 = vld [vmem:[#allocation5] sm:$0xf]
    %v91 = vld [vmem:[#allocation5 + $0x4] sm:$0xf]
    %v92 = vld [vmem:[#allocation5 + $0x8] sm:$0xf]
    %v93 = vld [vmem:[#allocation5 + $0xc] sm:$0xf]
    %v94 = vld [vmem:[%s4] sm:$0x1]
    %v96 = vlaneseq
    %v97 = vshrl.u32 %v96, 7
    %v98 = vsub.s32 0, %v97
    %v99 = vrot.slane %v94, %v98
    %v105 = vunpack.c.l.b16 %v90
    %v106 = vunpack.c.l.b16 %v91
    %v107 = vunpack.c.l.b16 %v92
    %v108 = vunpack.c.l.b16 %v93
    %v109 = vpack.c.b16 %v106, %v105
    %v110 = vpack.c.b16 %v108, %v107
    %vm113 = vcmask 261120
    %v115 = vsel %vm113, %v89, 0
    %117 = vmatprep.subr.bf16.mxu0 0
    %118 = vmatpush1.bf16.msra.mxu0 0
    %119 = vmatprep.subr.bf16.mxu0 0
    %120 = vmatpush1.bf16.msra.mxu0 0
    %121 = vmatprep.subr.bf16.mxu0 0
    %122 = vmatpush1.bf16.msra.mxu0 0
    %123 = vmatprep.subr.bf16.mxu0 0
    %124 = vmatpush1.bf16.msra.mxu0 0
    %125 = vmatprep.subr.bf16.mxu0 0
    %126 = vmatpush1.bf16.msra.mxu0 0
    %127 = vmatprep.subr.bf16.mxu0 0
    %128 = vmatpush1.bf16.msra.mxu0 0
    %129 = vmatprep.subr.bf16.mxu0 0
    %130 = vmatpush1.bf16.msra.mxu0 %v110
    %131 = vmatprep.subr.bf16.mxu0 0
    %132 = vmatpush1.bf16.msra.mxu0 %v109
    %133 = vmatprep.subr.bf16.mxu0 0
    %134 = vmatpush2.bf16.msra.mxu0 0
    %135 = vmatprep.subr.bf16.mxu0 0
    %136 = vmatpush2.bf16.msra.mxu0 0
    %137 = vmatprep.subr.bf16.mxu0 0
    %138 = vmatpush2.bf16.msra.mxu0 0
    %139 = vmatprep.subr.bf16.mxu0 0
    %140 = vmatpush2.bf16.msra.mxu0 0
    %141 = vmatprep.subr.bf16.mxu0 0
    %142 = vmatpush2.bf16.msra.mxu0 0
    %143 = vmatprep.subr.bf16.mxu0 0
    %144 = vmatpush2.bf16.msra.mxu0 0
    %145 = vmatprep.subr.bf16.mxu0 0
    %146 = vmatpush2.bf16.msra.mxu0 0
    %147 = vmatprep.subr.bf16.mxu0 0
    %148 = vmatpush2.bf16.msra.mxu0 0
    %149 = vmatprep.mubr.bf16.mxu0 0
    %150 = vmatmul.mubr.bf16.gmra.mxu0 %v115
    %v151 = vpop.f32.mrf.mxu0
    %v152 = vadd.f32 %v99, %v151
    %v153 = vpop.f32.mrf.mxu0
    %v154 = vpop.f32.mrf.mxu0
    %v155 = vadd.f32 %v99, %v154
    %v156 = vpop.f32.mrf.mxu0
    %157 = vdwg.mxu0
    %v158 = vpack.c.bf16 %v155, %v152
    %v160 = vunpack.c.l.b16 %v158
    %v161 = vunpack.c.h.b16 %v158
    %v162 = vpack.c.b16 %v160, %v160
    %v163 = vpack.c.b16 %v161, %v161
    %vm166 = vcmask 257024
    %167 = vst.msk [vmem:[#allocation10] sm:$0xf] %vm166, %v162
    %168 = vst.msk [vmem:[#allocation10 + $0x4] sm:$0xf] %vm166, %v163
    %v169 = vld [vmem:[#allocation7] sm:$0xf]
    %v170 = vld [vmem:[#allocation7 + $0x4] sm:$0xf]
    %v171 = vld [vmem:[#allocation7 + $0x8] sm:$0xf]
    %v172 = vld [vmem:[#allocation7 + $0xc] sm:$0xf]
    %v173 = vld [vmem:[%s5] sm:$0x1]
    %v175 = vlaneseq
    %v176 = vshrl.u32 %v175, 7
    %v177 = vsub.s32 0, %v176
    %v178 = vrot.slane %v173, %v177
    %v184 = vunpack.c.l.b16 %v169
    %v185 = vunpack.c.l.b16 %v170
    %v186 = vunpack.c.l.b16 %v171
    %v187 = vunpack.c.l.b16 %v172
    %v188 = vpack.c.b16 %v185, %v184
    %v189 = vpack.c.b16 %v187, %v186
    %192 = vmatprep.subr.bf16.mxu0 0
    %193 = vmatpush1.bf16.msra.mxu0 0
    %194 = vmatprep.subr.bf16.mxu0 0
    %195 = vmatpush1.bf16.msra.mxu0 0
    %196 = vmatprep.subr.bf16.mxu0 0
    %197 = vmatpush1.bf16.msra.mxu0 0
    %198 = vmatprep.subr.bf16.mxu0 0
    %199 = vmatpush1.bf16.msra.mxu0 0
    %200 = vmatprep.subr.bf16.mxu0 0
    %201 = vmatpush1.bf16.msra.mxu0 0
    %202 = vmatprep.subr.bf16.mxu0 0
    %203 = vmatpush1.bf16.msra.mxu0 0
    %204 = vmatprep.subr.bf16.mxu0 0
    %205 = vmatpush1.bf16.msra.mxu0 %v189
    %206 = vmatprep.subr.bf16.mxu0 0
    %207 = vmatpush1.bf16.msra.mxu0 %v188
    %208 = vmatprep.subr.bf16.mxu0 0
    %209 = vmatpush2.bf16.msra.mxu0 0
    %210 = vmatprep.subr.bf16.mxu0 0
    %211 = vmatpush2.bf16.msra.mxu0 0
    %212 = vmatprep.subr.bf16.mxu0 0
    %213 = vmatpush2.bf16.msra.mxu0 0
    %214 = vmatprep.subr.bf16.mxu0 0
    %215 = vmatpush2.bf16.msra.mxu0 0
    %216 = vmatprep.subr.bf16.mxu0 0
    %217 = vmatpush2.bf16.msra.mxu0 0
    %218 = vmatprep.subr.bf16.mxu0 0
    %219 = vmatpush2.bf16.msra.mxu0 0
    %220 = vmatprep.subr.bf16.mxu0 0
    %221 = vmatpush2.bf16.msra.mxu0 0
    %222 = vmatprep.subr.bf16.mxu0 0
    %223 = vmatpush2.bf16.msra.mxu0 0
    %224 = vmatprep.mubr.bf16.mxu0 0
    %225 = vmatmul.mubr.bf16.gmra.mxu0 %v115
    %v226 = vpop.f32.mrf.mxu0
    %v227 = vadd.f32 %v178, %v226
    %v228 = vpop.f32.mrf.mxu0
    %v229 = vpop.f32.mrf.mxu0
    %v230 = vadd.f32 %v178, %v229
    %v231 = vpop.f32.mrf.mxu0
    %232 = vdwg.mxu0
    %v233 = vpack.c.bf16 %v230, %v227
    %v235 = vunpack.c.l.b16 %v233
    %v236 = vunpack.c.h.b16 %v233
    %v237 = vpack.c.b16 %v235, %v235
    %v238 = vpack.c.b16 %v236, %v236
    %241 = vst.msk [vmem:[#allocation11] sm:$0xf] %vm166, %v237
    %242 = vst.msk [vmem:[#allocation11 + $0x4] sm:$0xf] %vm166, %v238
    %v243 = vld [vmem:[#allocation8] sm:$0xf]
    %v244 = vld [vmem:[#allocation8 + $0x4] sm:$0xf]
    %v245 = vld [vmem:[#allocation8 + $0x8] sm:$0xf]
    %v246 = vld [vmem:[#allocation8 + $0xc] sm:$0xf]
    %v247 = vld [vmem:[%s6] sm:$0x1]
    %v249 = vlaneseq
    %v250 = vshrl.u32 %v249, 7
    %v251 = vsub.s32 0, %v250
    %v252 = vrot.slane %v247, %v251
    %v258 = vunpack.c.l.b16 %v243
    %v259 = vunpack.c.l.b16 %v244
    %v260 = vunpack.c.l.b16 %v245
    %v261 = vunpack.c.l.b16 %v246
    %v262 = vpack.c.b16 %v259, %v258
    %v263 = vpack.c.b16 %v261, %v260
    %266 = vmatprep.subr.bf16.mxu0 0
    %267 = vmatpush1.bf16.msra.mxu0 0
    %268 = vmatprep.subr.bf16.mxu0 0
    %269 = vmatpush1.bf16.msra.mxu0 0
    %270 = vmatprep.subr.bf16.mxu0 0
    %271 = vmatpush1.bf16.msra.mxu0 0
    %272 = vmatprep.subr.bf16.mxu0 0
    %273 = vmatpush1.bf16.msra.mxu0 0
    %274 = vmatprep.subr.bf16.mxu0 0
    %275 = vmatpush1.bf16.msra.mxu0 0
    %276 = vmatprep.subr.bf16.mxu0 0
    %277 = vmatpush1.bf16.msra.mxu0 0
    %278 = vmatprep.subr.bf16.mxu0 0
    %279 = vmatpush1.bf16.msra.mxu0 %v263
    %280 = vmatprep.subr.bf16.mxu0 0
    %281 = vmatpush1.bf16.msra.mxu0 %v262
    %282 = vmatprep.subr.bf16.mxu0 0
    %283 = vmatpush2.bf16.msra.mxu0 0
    %284 = vmatprep.subr.bf16.mxu0 0
    %285 = vmatpush2.bf16.msra.mxu0 0
    %286 = vmatprep.subr.bf16.mxu0 0
    %287 = vmatpush2.bf16.msra.mxu0 0
    %288 = vmatprep.subr.bf16.mxu0 0
    %289 = vmatpush2.bf16.msra.mxu0 0
    %290 = vmatprep.subr.bf16.mxu0 0
    %291 = vmatpush2.bf16.msra.mxu0 0
    %292 = vmatprep.subr.bf16.mxu0 0
    %293 = vmatpush2.bf16.msra.mxu0 0
    %294 = vmatprep.subr.bf16.mxu0 0
    %295 = vmatpush2.bf16.msra.mxu0 0
    %296 = vmatprep.subr.bf16.mxu0 0
    %297 = vmatpush2.bf16.msra.mxu0 0
    %298 = vmatprep.mubr.bf16.mxu0 0
    %299 = vmatmul.mubr.bf16.gmra.mxu0 %v115
    %v300 = vpop.f32.mrf.mxu0
    %v301 = vadd.f32 %v252, %v300
    %v302 = vpop.f32.mrf.mxu0
    %v303 = vpop.f32.mrf.mxu0
    %v304 = vadd.f32 %v252, %v303
    %v305 = vpop.f32.mrf.mxu0
    %306 = vdwg.mxu0
    %v307 = vpack.c.bf16 %v304, %v301
    %v309 = vunpack.c.l.b16 %v307
    %v310 = vunpack.c.h.b16 %v307
    %v311 = vpack.c.b16 %v309, %v309
    %v312 = vpack.c.b16 %v310, %v310
    %315 = vst.msk [vmem:[#allocation13] sm:$0xf] %vm166, %v311
    %316 = vst.msk [vmem:[#allocation13 + $0x4] sm:$0xf] %vm166, %v312
    // Predicated region
    $region46: #{tpu_custom_call.1} parent=1 // pred_check
      _
    $region47: #{tpu_custom_call.1} parent=1 // pred_check_branch
      %318 = sbr.rel (0) target = $region49
    $region48: #{tpu_custom_call.1} parent=1 // pred_region
      %s320 = ssub.s32 128, 128
      %321 = vsyncadd [#allocation4], %s320
      %s322 = sshll.u32 [#allocation10], 4
      %s323 = int_to_ptr.vmem [resolvable:$true] %s322
      %328 = dma.vmem_to_hbm [thread:$0]  %s323, 128, %s7, [#allocation4], 64, 64, 4
    $region49: #{tpu_custom_call.1} parent=1 // pred_fallthru
      _
    // Predicated region
    $region50: #{tpu_custom_call.1} parent=1 // pred_check
      _
    $region51: #{tpu_custom_call.1} parent=1 // pred_check_branch
      %330 = sbr.rel (0) target = $region53
    $region52: #{tpu_custom_call.1} parent=1 // pred_region
      %s332 = ssub.s32 128, 128
      %333 = vsyncadd [#allocation12], %s332
      %s334 = sshll.u32 [#allocation11], 4
      %s335 = int_to_ptr.vmem [resolvable:$true] %s334
      %340 = dma.vmem_to_hbm [thread:$0]  %s335, 128, %s8, [#allocation12], 64, 64, 4
    $region53: #{tpu_custom_call.1} parent=1 // pred_fallthru
      _
    // Predicated region
    $region54: #{tpu_custom_call.1} parent=1 // pred_check
      _
    $region55: #{tpu_custom_call.1} parent=1 // pred_check_branch
      %342 = sbr.rel (0) target = $region57
    $region56: #{tpu_custom_call.1} parent=1 // pred_region
      %s344 = ssub.s32 128, 128
      %345 = vsyncadd [#allocation12], %s344
      %s346 = sshll.u32 [#allocation13], 4
      %s347 = int_to_ptr.vmem [resolvable:$true] %s346
      %352 = dma.vmem_to_hbm [thread:$0]  %s347, 128, %s9, [#allocation12], 64, 64, 4
    $region57: #{tpu_custom_call.1} parent=1 // pred_fallthru
      _
    // Predicated region
    $region58: #{tpu_custom_call.1} parent=1 // pred_check
      _
    $region59: #{tpu_custom_call.1} parent=1 // pred_check_branch
      %354 = sbr.rel (0) target = $region61
    $region60: #{tpu_custom_call.1} parent=1 // pred_region
      %355 = dma.done [#allocation4], 128
    $region61: #{tpu_custom_call.1} parent=1 // pred_fallthru
      _
    // Predicated region
    $region62: #{tpu_custom_call.1} parent=1 // pred_check
      _
    $region63: #{tpu_custom_call.1} parent=1 // pred_check_branch
      %357 = sbr.rel (0) target = $region65
    $region64: #{tpu_custom_call.1} parent=1 // pred_region
      %358 = dma.done [#allocation12], 128
    $region65: #{tpu_custom_call.1} parent=1 // pred_fallthru
      _
    // Predicated region
    $region66: #{tpu_custom_call.1} parent=1 // pred_check
      _
    $region67: #{tpu_custom_call.1} parent=1 // pred_check_branch
      %360 = sbr.rel (0) target = $region69
    $region68: #{tpu_custom_call.1} parent=1 // pred_region
      %361 = dma.done [#allocation12], 128
    $region69: #{tpu_custom_call.1} parent=1 // pred_fallthru
      _
    %362 = vsyncpa [#allocation3], 1
    %363 = vsyncpa [#allocation6], 1
    %364 = vsyncpa [#allocation9], 1
    %365 = vsyncpa [#allocation4], 1
    %366 = vsyncpa [#allocation12], 1

</llo_original>
